<compile_context>
chip_gen: v6e
topology: v6e:2x2x1
jax: 0.10.0
libtpu: 0.0.40
codegen_flags: <defaults>
</compile_context>

<pallas_src>
import functools

import jax
import jax.numpy as jnp
from jax.experimental import pallas as pl
from jax.experimental.pallas import tpu as pltpu


def _polyphase_params(w_oihw, bias, gamma, beta, run_mean, run_var, eps, n_pad):
    """Polyphase im2col weight (9*Cin, n_pad) bf16 with BN scale folded in (f32),
    plus the (1, n_pad) f32 shift (conv bias + BN shift).

    Both use the SAME trailing (a, b, Cout) phase blocking:
      column = (a*2 + b) * Cout + co,   row = (dy*3 + dx) * Cin + ci
    """
    Cout, Cin = w_oihw.shape[0], w_oihw.shape[1]
    w = jnp.transpose(w_oihw, (2, 3, 1, 0)).astype(jnp.float32)  # (dy, dx, Cin, Cout)
    # Nearest 2x upsample collapses the 3x3 taps of output row-phase a onto the
    # padded original-resolution row offsets {a+0, a+1} (same for columns):
    taps = {(0, 0): (0,), (0, 1): (1, 2), (1, 0): (0, 1), (1, 1): (2,)}
    wbig = jnp.zeros((3, 3, Cin, 2, 2, Cout), jnp.float32)
    for a in range(2):
        for b in range(2):
            for r in range(2):
                for s in range(2):
                    w2 = sum(w[dy, dx] for dy in taps[(a, r)] for dx in taps[(b, s)])
                    wbig = wbig.at[a + r, b + s, :, a, b, :].add(w2)

    # Fold BN (eval mode) + conv bias in f32 before the bf16 cast.
    scale = gamma / jnp.sqrt(run_var + eps)                       # (Cout,)
    shift = (bias - run_mean) * scale + beta                      # (Cout,)
    wbig = wbig * scale[None, None, None, None, None, :]          # per output column
    w_mat = wbig.reshape(9 * Cin, 4 * Cout)
    shift4 = jnp.broadcast_to(shift, (2, 2, Cout)).reshape(4 * Cout)  # same blocking

    # Pad output lanes to n_pad (multiple of 128) for unmasked, lane-dense stores.
    w_mat = jnp.pad(w_mat, ((0, 0), (0, n_pad - 4 * Cout)))
    shift4 = jnp.pad(shift4, (0, n_pad - 4 * Cout))
    return w_mat.astype(jnp.bfloat16), shift4.reshape(1, n_pad).astype(jnp.float32)


def _decoder_block_kernel(x_ref, w_ref, shift_ref, o_ref):
    # x_ref:     (1, H+2, W+2, Cin) bf16  whole padded image (resident across H-tiles)
    # w_ref:     (9*Cin, Npad)      bf16  polyphase weights, BN scale folded in
    # shift_ref: (1, Npad)          f32   conv bias + BN shift (phase-blocked columns)
    # o_ref:     (1, th*W, Npad)    bf16  phase-blocked output rows of this H-tile
    _, Hp, Wp, Cin = x_ref.shape
    W = Wp - 2
    th = o_ref.shape[1] // W
    K = w_ref.shape[0]

    row0 = pl.multiple_of(pl.program_id(1) * th, th)
    xw = x_ref[0, pl.ds(row0, th + 2), :, :]                    # (th+2, W+2, Cin) bf16 halo

    # im2col in bf16: the nine 3x3 taps concatenated on the lane (channel) axis.
    # TODO(synk): for Cin >= 128 (v7x 64 MiB VMEM) switch to 9 accumulating jnp.dot
    # calls on the tap slices instead of materializing the concatenated LHS.
    taps = [xw[dy:dy + th, dx:dx + W, :] for dy in range(3) for dx in range(3)]
    patches = jnp.concatenate(taps, axis=-1).reshape(th * W, K)  # bf16; layout-free if W%8==0

    # One MXU matmul produces all 4 upsample phases at once (f32 accumulation).
    acc = jnp.dot(patches, w_ref[...], preferred_element_type=jnp.float32)

    y = acc + shift_ref[...]                                     # bias + BN (scale in weights)
    o_ref[...] = jnp.maximum(y, 0.0).astype(o_ref.dtype)[None]   # ReLU, bf16 writeback


def _pick_row_tile(H, W, Cin, n_pad, budget_bytes=4 << 20):
    """Largest divisor of H whose per-step working set fits a small VMEM budget."""
    per_row = W * (9 * Cin * 2 + n_pad * 4 + 2 * n_pad * 2)  # bf16 patches + f32 acc + 2x bf16 out
    best = 1
    for d in range(1, H + 1):
        if H % d == 0 and d * per_row <= budget_bytes:
            best = d
    return best


@functools.partial(jax.jit, static_argnames=("eps", "row_tile"))
def decoder_block(x_nchw, w_oihw, bias, gamma, beta, run_mean, run_var,
                  *, eps=1e-5, row_tile=None):
    """Forward pass of DecoderBlock. x_nchw: (N, Cin, H, W) float32 -> (N, Cout, 2H, 2W)."""
    N, Cin, H, W = x_nchw.shape
    Cout = w_oihw.shape[0]
    n_pad = max(128, -(-4 * Cout // 128) * 128)                  # lane-dense output width

    th = row_tile if row_tile is not None else _pick_row_tile(H, W, Cin, n_pad)
    assert H % th == 0, (H, th)

    # NCHW -> NHWC at the module boundary (channels on the lane axis).
    # TODO(synk): in a multi-block decoder keep activations NHWC end-to-end so this
    # per-block transpose disappears.
    x_nhwc = jnp.transpose(x_nchw, (0, 2, 3, 1))
    # Zero-pad ORIGINAL resolution only (the 2x upsample is folded into the weights).
    # TODO(synk): fold the pad into the kernel (pre-zeroed VMEM scratch + manual DMA)
    # to remove one HBM pass over the input.
    x_pad = jnp.pad(x_nhwc, ((0, 0), (1, 1), (1, 1), (0, 0))).astype(jnp.bfloat16)

    w_mat, shift4 = _polyphase_params(
        w_oihw, bias, gamma, beta, run_mean, run_var, eps, n_pad)

    out_flat = pl.pallas_call(
        _decoder_block_kernel,
        out_shape=jax.ShapeDtypeStruct((N, H * W, n_pad), jnp.bfloat16),
        grid_spec=pltpu.PrefetchScalarGridSpec(
            num_scalar_prefetch=0,
            grid=(N, H // th),
            in_specs=[
                pl.BlockSpec((1, H + 2, W + 2, Cin), lambda n, i: (n, 0, 0, 0)),
                pl.BlockSpec((9 * Cin, n_pad), lambda n, i: (0, 0)),
                pl.BlockSpec((1, n_pad), lambda n, i: (0, 0)),
            ],
            out_specs=pl.BlockSpec((1, th * W, n_pad), lambda n, i: (n, i, 0)),
        ),
        compiler_params=pltpu.CompilerParams(
            dimension_semantics=("parallel", "parallel")),
    )(x_pad, w_mat, shift4)

    # Phase-blocked bf16 -> NCHW: slice off the lane padding, un-block the 4 phases
    # (the single transpose the NCHW boundary requires anyway, done in bf16).
    y = out_flat[:, :, :4 * Cout]
    y6 = y.reshape(N, H, W, 2, 2, Cout)                          # (n, i, j, a, b, c)
    out = jnp.transpose(y6, (0, 5, 1, 3, 2, 4))                  # (n, c, i, a, j, b)
    return out.reshape(N, Cout, 2 * H, 2 * W).astype(jnp.float32)


def _reference(x_nchw, w_oihw, bias, gamma, beta, run_mean, run_var, eps=1e-5):
    x_up = jnp.repeat(jnp.repeat(x_nchw, 2, axis=2), 2, axis=3)
    x_nhwc = jnp.transpose(x_up, (0, 2, 3, 1))
    w_hwio = jnp.transpose(w_oihw, (2, 3, 1, 0))
    y = jax.lax.conv_general_dilated(
        x_nhwc, w_hwio, window_strides=(1, 1), padding="SAME",
        dimension_numbers=("NHWC", "HWIO", "NHWC"),
        precision=jax.lax.Precision.HIGHEST)
    y = y + bias[None, None, None, :]
    y = (y - run_mean) / jnp.sqrt(run_var + eps) * gamma + beta
    y = jnp.maximum(y, 0.0)
    return jnp.transpose(y, (0, 3, 1, 2))


if __name__ == "__main__":
    key = jax.random.PRNGKey(0)
    k_x, k_w, k_b, k_g, k_bt, k_m, k_v = jax.random.split(key, 7)

    N, Cin, H, W = 2, 4, 16, 16
    Cout = 8

    x = jax.random.normal(k_x, (N, Cin, H, W), jnp.float32)
    w = jax.random.normal(k_w, (Cout, Cin, 3, 3), jnp.float32) * 0.1
    b = jax.random.normal(k_b, (Cout,), jnp.float32) * 0.1
    gamma = 1.0 + 0.1 * jax.random.normal(k_g, (Cout,), jnp.float32)
    beta = 0.1 * jax.random.normal(k_bt, (Cout,), jnp.float32)
    run_mean = 0.1 * jax.random.normal(k_m, (Cout,), jnp.float32)
    run_var = jnp.abs(1.0 + 0.1 * jax.random.normal(k_v, (Cout,), jnp.float32))

    # row_tile=8 exercises the multi-H-tile (halo) path at this small test size.
    out = decoder_block(x, w, b, gamma, beta, run_mean, run_var, row_tile=8)
    out = jax.block_until_ready(out)

    ref = _reference(x, w, b, gamma, beta, run_mean, run_var)
    assert out.shape == (N, Cout, 2 * H, 2 * W), out.shape
    # Tolerance accommodates bf16 MXU operands and bf16 writeback (f32 accumulation).
    assert jnp.allclose(out, ref, atol=5e-2, rtol=5e-2), "mismatch vs reference"

    print("KERNEL_OK")
</pallas_src>

<mosaic_0001>
module attributes {stable_mosaic.version = 11 : i64} {
  func.func @_decoder_block_kernel(%arg0: i32, %arg1: i32, %arg2: memref<1x18x18x4xbf16, #tpu.memory_space<vmem>>, %arg3: memref<36x128xbf16, #tpu.memory_space<vmem>>, %arg4: memref<1x128xf32, #tpu.memory_space<vmem>>, %arg5: memref<1x128x128xbf16, #tpu.memory_space<vmem>>) attributes {dimension_semantics = [#tpu.dimension_semantics<parallel>, #tpu.dimension_semantics<parallel>], iteration_bounds = array<i64: 2, 2>, scalar_prefetch = 0 : i64, scratch_operands = 0 : i64, tpu.core_type = #tpu.core_type<tc>, window_params = [{transform_indices = @transform_0, window_bounds = array<i64: 1, 18, 18, 4>}, {pipeline_mode = #tpu.pipeline_mode<synchronous>, transform_indices = @transform_1, window_bounds = array<i64: 36, 128>}, {pipeline_mode = #tpu.pipeline_mode<synchronous>, transform_indices = @transform_2, window_bounds = array<i64: 1, 128>}, {transform_indices = @transform_3, window_bounds = array<i64: 1, 128, 128>}]} {
    %c8_i32 = arith.constant 8 : i32
    %0 = arith.muli %arg1, %c8_i32 : i32
    %1 = tpu.assume_multiple %0, 8 : i32
    %c0 = arith.constant 0 : index
    %2 = arith.index_cast %1 : i32 to index
    %c0_0 = arith.constant 0 : index
    %c0_1 = arith.constant 0 : index
    %3 = vector.load %arg2[%c0, %2, %c0_0, %c0_1] : memref<1x18x18x4xbf16, #tpu.memory_space<vmem>>, vector<1x10x18x4xbf16>
    %4 = vector.shape_cast %3 : vector<1x10x18x4xbf16> to vector<10x18x4xbf16>
    %5 = vector.extract_strided_slice %4 {offsets = [0, 0, 0], sizes = [8, 16, 4], strides = [1, 1, 1]} : vector<10x18x4xbf16> to vector<8x16x4xbf16>
    %6 = vector.extract_strided_slice %4 {offsets = [0, 1, 0], sizes = [8, 16, 4], strides = [1, 1, 1]} : vector<10x18x4xbf16> to vector<8x16x4xbf16>
    %7 = vector.extract_strided_slice %4 {offsets = [0, 2, 0], sizes = [8, 16, 4], strides = [1, 1, 1]} : vector<10x18x4xbf16> to vector<8x16x4xbf16>
    %8 = vector.extract_strided_slice %4 {offsets = [1, 0, 0], sizes = [8, 16, 4], strides = [1, 1, 1]} : vector<10x18x4xbf16> to vector<8x16x4xbf16>
    %9 = vector.extract_strided_slice %4 {offsets = [1, 1, 0], sizes = [8, 16, 4], strides = [1, 1, 1]} : vector<10x18x4xbf16> to vector<8x16x4xbf16>
    %10 = vector.extract_strided_slice %4 {offsets = [1, 2, 0], sizes = [8, 16, 4], strides = [1, 1, 1]} : vector<10x18x4xbf16> to vector<8x16x4xbf16>
    %11 = vector.extract_strided_slice %4 {offsets = [2, 0, 0], sizes = [8, 16, 4], strides = [1, 1, 1]} : vector<10x18x4xbf16> to vector<8x16x4xbf16>
    %12 = vector.extract_strided_slice %4 {offsets = [2, 1, 0], sizes = [8, 16, 4], strides = [1, 1, 1]} : vector<10x18x4xbf16> to vector<8x16x4xbf16>
    %13 = vector.extract_strided_slice %4 {offsets = [2, 2, 0], sizes = [8, 16, 4], strides = [1, 1, 1]} : vector<10x18x4xbf16> to vector<8x16x4xbf16>
    %14 = tpu.concatenate %5, %6, %7, %8, %9, %10, %11, %12, %13 in 2 : vector<8x16x4xbf16>, vector<8x16x4xbf16>, vector<8x16x4xbf16>, vector<8x16x4xbf16>, vector<8x16x4xbf16>, vector<8x16x4xbf16>, vector<8x16x4xbf16>, vector<8x16x4xbf16>, vector<8x16x4xbf16> -> vector<8x16x36xbf16>
    %15 = vector.shape_cast %14 : vector<8x16x36xbf16> to vector<128x36xbf16>
    %c0_2 = arith.constant 0 : index
    %c0_3 = arith.constant 0 : index
    %16 = vector.load %arg3[%c0_2, %c0_3] : memref<36x128xbf16, #tpu.memory_space<vmem>>, vector<36x128xbf16>
    %cst = arith.constant dense<0.000000e+00> : vector<128x128xf32>
    %17 = tpu.matmul %15, %16, %cst {dimension_numbers = #tpu.dot_dimension_numbers<[1], [0], [0], [1], [0, 0, 1, 1], [], []>} : vector<128x36xbf16>, vector<36x128xbf16>, vector<128x128xf32> -> vector<128x128xf32>
    %c0_4 = arith.constant 0 : index
    %c0_5 = arith.constant 0 : index
    %18 = vector.load %arg4[%c0_4, %c0_5] : memref<1x128xf32, #tpu.memory_space<vmem>>, vector<1x128xf32>
    %19 = vector.broadcast %18 : vector<1x128xf32> to vector<128x128xf32>
    %20 = arith.addf %17, %19 : vector<128x128xf32>
    %cst_6 = arith.constant 0.000000e+00 : f32
    %21 = vector.broadcast %cst_6 : f32 to vector<128x128xf32>
    %22 = arith.maximumf %20, %21 : vector<128x128xf32>
    %23 = arith.truncf %22 : vector<128x128xf32> to vector<128x128xbf16>
    %24 = vector.shape_cast %23 : vector<128x128xbf16> to vector<1x128x128xbf16>
    %c0_7 = arith.constant 0 : index
    %c0_8 = arith.constant 0 : index
    %c0_9 = arith.constant 0 : index
    %25 = vector.load %arg5[%c0_7, %c0_8, %c0_9] : memref<1x128x128xbf16, #tpu.memory_space<vmem>>, vector<1x128x128xbf16>
    tpu.vector_store %arg5[%c0_7, %c0_8, %c0_9], %24 {strides = array<i32>} : memref<1x128x128xbf16, #tpu.memory_space<vmem>>, vector<1x128x128xbf16>,
    return
  }
  func.func @transform_0(%arg0: i32, %arg1: i32) -> (i32, i32, i32, i32) {
    %c0_i32 = arith.constant 0 : i32
    %c0_i32_0 = arith.constant 0 : i32
    %c0_i32_1 = arith.constant 0 : i32
    %c0_i32_2 = arith.constant 0 : i32
    return %arg0, %c0_i32, %c0_i32_0, %c0_i32_1 : i32, i32, i32, i32
  }
  func.func @transform_1(%arg0: i32, %arg1: i32) -> (i32, i32) {
    %c0_i32 = arith.constant 0 : i32
    %c0_i32_0 = arith.constant 0 : i32
    %c0_i32_1 = arith.constant 0 : i32
    return %c0_i32, %c0_i32_0 : i32, i32
  }
  func.func @transform_2(%arg0: i32, %arg1: i32) -> (i32, i32) {
    %c0_i32 = arith.constant 0 : i32
    %c0_i32_0 = arith.constant 0 : i32
    %c0_i32_1 = arith.constant 0 : i32
    return %c0_i32, %c0_i32_0 : i32, i32
  }
  func.func @transform_3(%arg0: i32, %arg1: i32) -> (i32, i32, i32) {
    %c0_i32 = arith.constant 0 : i32
    %c0_i32_0 = arith.constant 0 : i32
    return %arg0, %arg1, %c0_i32 : i32, i32, i32
  }
}

</mosaic_0001>

<llo_original>
// kernel: decoder_block.1
$region0: #{decoder_block.1}
  #allocation0 [shape = 'u32[]', space=smem, size = 0x4, offset = 0x4, fixed_abs, tag = 'smem constant byte address 0x4 - core index']
  #allocation1 [shape = 'u32[144,128]{1,0:T(1,128)}', space=vmem, size = 0x12000, scoped, tag = 'internal scratch']
  %s0 = inlined_call_operand.vmem [shape: bf16[2,18,18,4], index: 0, kind: input, shape index: {}]
  %s1 = inlined_call_operand.vmem [shape: bf16[36,128], index: 1, kind: input, shape index: {}]
  %s2 = inlined_call_operand.vmem [shape: f32[1,128], index: 2, kind: input, shape index: {}]
  %s3 = inlined_call_operand.vmem [shape: bf16[2,256,128], index: 3, kind: output, shape index: {}]
  %s4 = sld [smem:[#allocation0]]
  $region45: #{decoder_block.1} parent=0
    _
  %s6 = ssub.s32 1, %s4
  %s7 = scalar_select 0, %s6, %s4
  loop: start=0, step=1, limit=6
  $region2: #{decoder_block.1} parent=0 // loop_pre_header
    _
  $region3: #{decoder_block.1} parent=0 // loop_header
    %s9 = sphi 0, %s13
    %p10 = scmp.ge.s32.totalorder %s9, 6
    %s16 = sphi 0, %s28
    %s17 = sphi 0, %s24
    %s18 = sphi 0, %s16
    %s19 = sphi 0, %s17
    %s20 = sphi 0, %s18
    %s21 = sphi 0, %s19
    %s31 = sphi 0, %s33
    %s34 = sphi 0, %s31
    %s35 = sphi 0, %s34
    %s51 = sphi 0, %s35
    %s55 = sphi 0, %s55
    %s57 = sphi 0, %s55
    %s58 = sphi 0, %s57
    %s72 = sphi 0, %s58
    %s76 = sphi 0, %s76
    %s78 = sphi 0, %s76
    %s79 = sphi 0, %s78
    %s93 = sphi 0, %s79
    %s101 = sphi 0, %s103
    %s104 = sphi 0, %s101
    %s105 = sphi 0, %s104
    %s121 = sphi 0, %s105
  $region4: #{decoder_block.1} parent=0 // loop_header_branch
    %12 = sbr.rel (%p10) target = $region8
  $region5: #{decoder_block.1} parent=0 // loop_body
    %s14 = ssub.s32 %s9, 1
    %s15 = ssub.s32 %s9, 2
    %s22 = sadd.s32 1, %s17
    %p23 = scmp.ge.s32.totalorder %s22, 2
    %s24 = scalar_select %p23, 0, %s22
    %s25 = sadd.s32 1, %s16
    %s26 = scalar_select %p23, %s25, %s16
    %p27 = scmp.ge.s32.totalorder %s26, 2
    %s28 = scalar_select %p27, 0, %s26
    %s29 = ssub.s32 %s16, %s28
    %p30 = scmp.eq.s32.totalorder %s29, 0
    %s32 = sadd.s32 %s31, 1
    %s33 = scalar_select %p30, %s31, %s32
    %p36 = pneg %p30
    %p37 = scmp.eq.s32.totalorder %s9, 3
    %p38 = por %p36, %p37
    %p39 = scmp.ne.s32.totalorder %s31, %s34
    %p40 = scmp.eq.s32.totalorder %s9, 0
    %p41 = por %p39, %p40
    %p42 = scmp.ne.s32.totalorder %s31, %s34
    %p43 = scmp.eq.s32.totalorder %s14, 3
    %p44 = por %p42, %p43
    %p45 = scmp.ne.s32.totalorder %s34, %s35
    %p46 = scmp.eq.s32.totalorder %s14, 0
    %p47 = por %p45, %p46
    %p48 = scmp.ne.s32.totalorder %s34, %s35
    %p49 = scmp.eq.s32.totalorder %s15, 3
    %p50 = por %p48, %p49
    %p52 = scmp.ne.s32.totalorder %s35, %s51
    %p53 = scmp.eq.s32.totalorder %s15, 0
    %p54 = por %p52, %p53
    %s56 = sadd.s32 %s55, 1
    %p59 = scmp.eq.s32.totalorder %s9, 3
    %p60 = scmp.ne.s32.totalorder %s55, %s57
    %p61 = scmp.eq.s32.totalorder %s9, 0
    %p62 = por %p60, %p61
    %p63 = scmp.ne.s32.totalorder %s55, %s57
    %p64 = scmp.eq.s32.totalorder %s14, 3
    %p65 = por %p63, %p64
    %p66 = scmp.ne.s32.totalorder %s57, %s58
    %p67 = scmp.eq.s32.totalorder %s14, 0
    %p68 = por %p66, %p67
    %p69 = scmp.ne.s32.totalorder %s57, %s58
    %p70 = scmp.eq.s32.totalorder %s15, 3
    %p71 = por %p69, %p70
    %p73 = scmp.ne.s32.totalorder %s58, %s72
    %p74 = scmp.eq.s32.totalorder %s15, 0
    %p75 = por %p73, %p74
    %s77 = sadd.s32 %s76, 1
    %p80 = scmp.eq.s32.totalorder %s9, 3
    %p81 = scmp.ne.s32.totalorder %s76, %s78
    %p82 = scmp.eq.s32.totalorder %s9, 0
    %p83 = por %p81, %p82
    %p84 = scmp.ne.s32.totalorder %s76, %s78
    %p85 = scmp.eq.s32.totalorder %s14, 3
    %p86 = por %p84, %p85
    %p87 = scmp.ne.s32.totalorder %s78, %s79
    %p88 = scmp.eq.s32.totalorder %s14, 0
    %p89 = por %p87, %p88
    %p90 = scmp.ne.s32.totalorder %s78, %s79
    %p91 = scmp.eq.s32.totalorder %s15, 3
    %p92 = por %p90, %p91
    %p94 = scmp.ne.s32.totalorder %s79, %s93
    %p95 = scmp.eq.s32.totalorder %s15, 0
    %p96 = por %p94, %p95
    %s97 = ssub.s32 %s16, %s28
    %s98 = ssub.s32 %s17, %s24
    %s99 = sor.u32 %s97, %s98
    %p100 = scmp.eq.s32.totalorder %s99, 0
    %s102 = sadd.s32 %s101, 1
    %s103 = scalar_select %p100, %s101, %s102
    %p106 = pneg %p100
    %p107 = scmp.eq.s32.totalorder %s9, 3
    %p108 = por %p106, %p107
    %p109 = scmp.ne.s32.totalorder %s101, %s104
    %p110 = scmp.eq.s32.totalorder %s9, 0
    %p111 = por %p109, %p110
    %p112 = scmp.ne.s32.totalorder %s101, %s104
    %p113 = scmp.eq.s32.totalorder %s14, 3
    %p114 = por %p112, %p113
    %p115 = scmp.ne.s32.totalorder %s104, %s105
    %p116 = scmp.eq.s32.totalorder %s14, 0
    %p117 = por %p115, %p116
    %p118 = scmp.ne.s32.totalorder %s104, %s105
    %p119 = scmp.eq.s32.totalorder %s15, 3
    %p120 = por %p118, %p119
    %p122 = scmp.ne.s32.totalorder %s105, %s121
    %p123 = scmp.eq.s32.totalorder %s15, 0
    %p124 = por %p122, %p123
    %p125 = scmp.le.s32.totalorder 1, %s9
    %p126 = scmp.lt.s32.totalorder %s9, 5
    %p127 = pnand %p125, %p126
    %p128 = pneg %p127
    // Predicated region
    $region9: #{decoder_block.1} parent=5 // pred_check
      _
    $region10: #{decoder_block.1} parent=5 // pred_check_branch
      %130 = sbr.rel (%p127) target = $region12
    $region11: #{decoder_block.1} parent=5 // pred_region
      %s131 = ssub.s32 %s9, 1
      // Predicated region
      $region13: #{decoder_block.1} parent=11 // pred_check
        %p132 = pneg %p68
      $region14: #{decoder_block.1} parent=11 // pred_check_branch
        %134 = sbr.rel (%p132) target = $region16
      $region15: #{decoder_block.1} parent=11 // pred_region
        _
      $region16: #{decoder_block.1} parent=11 // pred_fallthru
        _
      // Predicated region
      $region17: #{decoder_block.1} parent=11 // pred_check
        %p135 = pneg %p89
      $region18: #{decoder_block.1} parent=11 // pred_check_branch
        %137 = sbr.rel (%p135) target = $region20
      $region19: #{decoder_block.1} parent=11 // pred_region
        _
      $region20: #{decoder_block.1} parent=11 // pred_fallthru
        _
    $region12: #{decoder_block.1} parent=5 // pred_fallthru
      _
    %p138 = scmp.lt.s32.totalorder %s9, 4
    // Predicated region
    $region21: #{decoder_block.1} parent=5 // pred_check
      %p139 = pneg %p138
    $region22: #{decoder_block.1} parent=5 // pred_check_branch
      %141 = sbr.rel (%p139) target = $region24
    $region23: #{decoder_block.1} parent=5 // pred_region
      // Predicated region
      $region25: #{decoder_block.1} parent=23 // pred_check
        %p142 = pneg %p41
      $region26: #{decoder_block.1} parent=23 // pred_check_branch
        %144 = sbr.rel (%p142) target = $region28
      $region27: #{decoder_block.1} parent=23 // pred_region
        %p145 = scmp.lt.s32.totalorder %s16, 1
        %s146 = scalar_select %p145, %s16, 1
        %s147 = smul.addr %s146, 54
        %s148 = smul.addr %s147, 4
        %s149 = scalar_lea.vmem %s0, %s148
      $region28: #{decoder_block.1} parent=23 // pred_fallthru
        _
    $region24: #{decoder_block.1} parent=5 // pred_fallthru
      _
    %p150 = scmp.le.s32.totalorder 1, %s9
    %p151 = scmp.lt.s32.totalorder %s9, 5
    %p152 = pnand %p150, %p151
    %p153 = pneg %p152
    // Predicated region
    $region29: #{decoder_block.1} parent=5 // pred_check
      _
    $region30: #{decoder_block.1} parent=5 // pred_check_branch
      %155 = sbr.rel (%p152) target = $region32
    $region31: #{decoder_block.1} parent=5 // pred_region
      %s156 = ssub.s32 %s9, 1
      %p157 = scmp.lt.s32.totalorder %s18, 1
      %s158 = scalar_select %p157, %s18, 1
      %s159 = smul.addr %s158, 54
      %s160 = smul.addr %s159, 4
      %s161 = scalar_lea.vmem %s0, %s160
      %p162 = pneg %p47
      %p163 = pneg %p44
      %p164 = pneg %p68
      %p165 = pneg %p65
      %p166 = pneg %p89
      %p167 = pneg %p86
      %p168 = pneg %p117
      %p169 = pneg %p114
      %s170 = smul.u32 16, %s19
      %p171 = scmp.lt.s32.totalorder %s18, 1
      %s172 = scalar_select %p171, %s18, 1
      %p173 = scmp.lt.s32.totalorder %s170, 31
      %s174 = scalar_select %p173, %s170, 31
      %s175 = smul.addr %s172, 32
      %s176 = sadd.s32 %s174, %s175
      %s177 = smul.addr %s176, 4
      %s178 = scalar_lea.vmem %s3, %s177
      %p179 = scmp.lt.s32.totalorder %s18, 1
      %s180 = scalar_select %p179, %s18, 1
      %s181 = smul.addr %s180, 54
      %s182 = smul.addr %s181, 4
      %s183 = scalar_lea.vmem %s0, %s182
      %s184 = smul.u32 16, %s19
      %p185 = scmp.lt.s32.totalorder %s18, 1
      %s186 = scalar_select %p185, %s18, 1
      %p187 = scmp.lt.s32.totalorder %s184, 31
      %s188 = scalar_select %p187, %s184, 31
      %s189 = smul.addr %s186, 32
      %s190 = sadd.s32 %s188, %s189
      %s191 = smul.addr %s190, 4
      %s192 = scalar_lea.vmem %s3, %s191
      %s193 = smul.u32 16, %s19
      %s195 = smul.u32 %s19, 8
      %s196 = smul.u32 %s195, 3
      %s197 = smul.addr %s196, 4
      %s198 = scalar_lea.vmem %s183, %s197
      %v199 = vld [vmem:[%s198] sm:$0xf]
      %v200 = vld [vmem:[%s198 + $0x4] sm:$0xf]
      %v201 = vld [vmem:[%s198 + $0x8] sm:$0x1]
      %v202 = vld [vmem:[%s198 + $0xc] sm:$0xf]
      %v203 = vld [vmem:[%s198 + $0x10] sm:$0xf]
      %v204 = vld [vmem:[%s198 + $0x14] sm:$0x1]
      %v205 = vld [vmem:[%s198 + $0x18] sm:$0xf]
      %v206 = vld [vmem:[%s198 + $0x1c] sm:$0xf]
      %v207 = vld [vmem:[%s198 + $0x20] sm:$0x1]
      %v208 = vld [vmem:[%s198 + $0x24] sm:$0xf]
      %v209 = vld [vmem:[%s198 + $0x28] sm:$0xf]
      %v210 = vld [vmem:[%s198 + $0x2c] sm:$0x1]
      %v211 = vld [vmem:[%s198 + $0x30] sm:$0xf]
      %v212 = vld [vmem:[%s198 + $0x34] sm:$0xf]
      %v213 = vld [vmem:[%s198 + $0x38] sm:$0x1]
      %v214 = vld [vmem:[%s198 + $0x3c] sm:$0xf]
      %v215 = vld [vmem:[%s198 + $0x40] sm:$0xf]
      %v216 = vld [vmem:[%s198 + $0x44] sm:$0x1]
      %v217 = vld [vmem:[%s198 + $0x48] sm:$0xf]
      %v218 = vld [vmem:[%s198 + $0x4c] sm:$0xf]
      %v219 = vld [vmem:[%s198 + $0x50] sm:$0x1]
      %v220 = vld [vmem:[%s198 + $0x54] sm:$0xf]
      %v221 = vld [vmem:[%s198 + $0x58] sm:$0xf]
      %v222 = vld [vmem:[%s198 + $0x5c] sm:$0x1]
      %v223 = vld [vmem:[%s198 + $0x60] sm:$0xf]
      %v224 = vld [vmem:[%s198 + $0x64] sm:$0xf]
      %v225 = vld [vmem:[%s198 + $0x68] sm:$0x1]
      %v226 = vld [vmem:[%s198 + $0x6c] sm:$0xf]
      %v227 = vld [vmem:[%s198 + $0x70] sm:$0xf]
      %v228 = vld [vmem:[%s198 + $0x74] sm:$0x1]
      %v245 = vunpack.c.l.b16 %v199
      %v246 = vunpack.c.l.b16 %v200
      %v247 = vunpack.c.l.b16 %v202
      %v248 = vunpack.c.l.b16 %v203
      %v249 = vunpack.c.l.b16 %v205
      %v250 = vunpack.c.l.b16 %v206
      %v251 = vunpack.c.l.b16 %v208
      %v252 = vunpack.c.l.b16 %v209
      %v253 = vunpack.c.l.b16 %v211
      %v254 = vunpack.c.l.b16 %v212
      %v255 = vunpack.c.l.b16 %v214
      %v256 = vunpack.c.l.b16 %v215
      %v257 = vunpack.c.l.b16 %v217
      %v258 = vunpack.c.l.b16 %v218
      %v259 = vunpack.c.l.b16 %v220
      %v260 = vunpack.c.l.b16 %v221
      %v261 = vpack.c.b16 %v246, %v245
      %v262 = vpack.c.b16 %v248, %v247
      %v263 = vpack.c.b16 %v250, %v249
      %v264 = vpack.c.b16 %v252, %v251
      %v265 = vpack.c.b16 %v254, %v253
      %v266 = vpack.c.b16 %v256, %v255
      %v267 = vpack.c.b16 %v258, %v257
      %v268 = vpack.c.b16 %v260, %v259
      %v277 = vunpack.c.l.b16 %v201
      %v278 = vunpack.c.l.b16 %v204
      %v279 = vunpack.c.l.b16 %v207
      %v280 = vunpack.c.l.b16 %v210
      %v281 = vunpack.c.l.b16 %v213
      %v282 = vunpack.c.l.b16 %v216
      %v283 = vunpack.c.l.b16 %v219
      %v284 = vunpack.c.l.b16 %v222
      %v285 = vpack.c.b16 %v277, %v277
      %v286 = vpack.c.b16 %v278, %v278
      %v287 = vpack.c.b16 %v279, %v279
      %v288 = vpack.c.b16 %v280, %v280
      %v289 = vpack.c.b16 %v281, %v281
      %v290 = vpack.c.b16 %v282, %v282
      %v291 = vpack.c.b16 %v283, %v283
      %v292 = vpack.c.b16 %v284, %v284
      %vm293 = vsmask.f32 7424
      %v295 = vshrl.u32 %v261, 16
      %v297 = vshll.u32 %v261, 16
      %v299 = vrot.slane %v297, 1
      %v300 = vor.u32 %v295, %v299
      %v302 = vshll.u32 %v285, 16
      %v304 = vrot.slane %v302, 1
      %v305 = vsel %vm293, %v300, %v304
      %v307 = vshrl.u32 %v262, 16
      %v309 = vshll.u32 %v262, 16
      %v311 = vrot.slane %v309, 1
      %v312 = vor.u32 %v307, %v311
      %v314 = vshll.u32 %v286, 16
      %v316 = vrot.slane %v314, 1
      %v317 = vsel %vm293, %v312, %v316
      %v319 = vshrl.u32 %v263, 16
      %v321 = vshll.u32 %v263, 16
      %v323 = vrot.slane %v321, 1
      %v324 = vor.u32 %v319, %v323
      %v326 = vshll.u32 %v287, 16
      %v328 = vrot.slane %v326, 1
      %v329 = vsel %vm293, %v324, %v328
      %v331 = vshrl.u32 %v264, 16
      %v333 = vshll.u32 %v264, 16
      %v335 = vrot.slane %v333, 1
      %v336 = vor.u32 %v331, %v335
      %v338 = vshll.u32 %v288, 16
      %v340 = vrot.slane %v338, 1
      %v341 = vsel %vm293, %v336, %v340
      %v343 = vshrl.u32 %v265, 16
      %v345 = vshll.u32 %v265, 16
      %v347 = vrot.slane %v345, 1
      %v348 = vor.u32 %v343, %v347
      %v350 = vshll.u32 %v289, 16
      %v352 = vrot.slane %v350, 1
      %v353 = vsel %vm293, %v348, %v352
      %v355 = vshrl.u32 %v266, 16
      %v357 = vshll.u32 %v266, 16
      %v359 = vrot.slane %v357, 1
      %v360 = vor.u32 %v355, %v359
      %v362 = vshll.u32 %v290, 16
      %v364 = vrot.slane %v362, 1
      %v365 = vsel %vm293, %v360, %v364
      %v367 = vshrl.u32 %v267, 16
      %v369 = vshll.u32 %v267, 16
      %v371 = vrot.slane %v369, 1
      %v372 = vor.u32 %v367, %v371
      %v374 = vshll.u32 %v291, 16
      %v376 = vrot.slane %v374, 1
      %v377 = vsel %vm293, %v372, %v376
      %v379 = vshrl.u32 %v268, 16
      %v381 = vshll.u32 %v268, 16
      %v383 = vrot.slane %v381, 1
      %v384 = vor.u32 %v379, %v383
      %v386 = vshll.u32 %v292, 16
      %v388 = vrot.slane %v386, 1
      %v389 = vsel %vm293, %v384, %v388
      %390 = vrot.lane.b32.xlu0 %v305, 4
      %v391 = vpop.permute.xlu0 %390
      %392 = vrot.lane.b32.xlu0 %v317, 4
      %v393 = vpop.permute.xlu0 %392
      %394 = vrot.lane.b32.xlu0 %v329, 4
      %v395 = vpop.permute.xlu0 %394
      %396 = vrot.lane.b32.xlu0 %v341, 4
      %v397 = vpop.permute.xlu0 %396
      %398 = vrot.lane.b32.xlu0 %v353, 4
      %v399 = vpop.permute.xlu0 %398
      %400 = vrot.lane.b32.xlu0 %v365, 4
      %v401 = vpop.permute.xlu0 %400
      %402 = vrot.lane.b32.xlu0 %v377, 4
      %v403 = vpop.permute.xlu0 %402
      %404 = vrot.lane.b32.xlu0 %v389, 4
      %v405 = vpop.permute.xlu0 %404
      %vm406 = vcmask 1046528
      %v407 = vrot.slane %v261, 1
      %v408 = vrot.slane %v285, 1
      %v409 = vsel %vm406, %v407, %v408
      %v410 = vrot.slane %v262, 1
      %v411 = vrot.slane %v286, 1
      %v412 = vsel %vm406, %v410, %v411
      %v413 = vrot.slane %v263, 1
      %v414 = vrot.slane %v287, 1
      %v415 = vsel %vm406, %v413, %v414
      %v416 = vrot.slane %v264, 1
      %v417 = vrot.slane %v288, 1
      %v418 = vsel %vm406, %v416, %v417
      %v419 = vrot.slane %v265, 1
      %v420 = vrot.slane %v289, 1
      %v421 = vsel %vm406, %v419, %v420
      %v422 = vrot.slane %v266, 1
      %v423 = vrot.slane %v290, 1
      %v424 = vsel %vm406, %v422, %v423
      %v425 = vrot.slane %v267, 1
      %v426 = vrot.slane %v291, 1
      %v427 = vsel %vm406, %v425, %v426
      %v428 = vrot.slane %v268, 1
      %v429 = vrot.slane %v292, 1
      %v430 = vsel %vm406, %v428, %v429
      %431 = vrot.lane.b32.xlu0 %v409, 8
      %v432 = vpop.permute.xlu0 %431
      %433 = vrot.lane.b32.xlu0 %v412, 8
      %v434 = vpop.permute.xlu0 %433
      %435 = vrot.lane.b32.xlu0 %v415, 8
      %v436 = vpop.permute.xlu0 %435
      %437 = vrot.lane.b32.xlu0 %v418, 8
      %v438 = vpop.permute.xlu0 %437
      %439 = vrot.lane.b32.xlu0 %v421, 8
      %v440 = vpop.permute.xlu0 %439
      %441 = vrot.lane.b32.xlu0 %v424, 8
      %v442 = vpop.permute.xlu0 %441
      %443 = vrot.lane.b32.xlu0 %v427, 8
      %v444 = vpop.permute.xlu0 %443
      %445 = vrot.lane.b32.xlu0 %v430, 8
      %v446 = vpop.permute.xlu0 %445
      %v449 = vunpack.c.l.b16 %v223
      %v450 = vunpack.c.l.b16 %v224
      %v451 = vpack.c.b16 %v450, %v449
      %452 = vrot.lane.b32.xlu0 %v262, 12
      %v453 = vpop.permute.xlu0 %452
      %454 = vrot.lane.b32.xlu0 %v263, 12
      %v455 = vpop.permute.xlu0 %454
      %456 = vrot.lane.b32.xlu0 %v264, 12
      %v457 = vpop.permute.xlu0 %456
      %458 = vrot.lane.b32.xlu0 %v265, 12
      %v459 = vpop.permute.xlu0 %458
      %460 = vrot.lane.b32.xlu0 %v266, 12
      %v461 = vpop.permute.xlu0 %460
      %462 = vrot.lane.b32.xlu0 %v267, 12
      %v463 = vpop.permute.xlu0 %462
      %464 = vrot.lane.b32.xlu0 %v268, 12
      %v465 = vpop.permute.xlu0 %464
      %466 = vrot.lane.b32.xlu0 %v451, 12
      %v467 = vpop.permute.xlu0 %466
      %v469 = vunpack.c.l.b16 %v225
      %v470 = vpack.c.b16 %v469, %v469
      %v472 = vshrl.u32 %v451, 16
      %v474 = vshll.u32 %v451, 16
      %v476 = vrot.slane %v474, 1
      %v477 = vor.u32 %v472, %v476
      %v479 = vshll.u32 %v470, 16
      %v481 = vrot.slane %v479, 1
      %v482 = vsel %vm293, %v477, %v481
      %483 = vrot.lane.b32.xlu0 %v317, 16
      %v484 = vpop.permute.xlu0 %483
      %485 = vrot.lane.b32.xlu0 %v329, 16
      %v486 = vpop.permute.xlu0 %485
      %487 = vrot.lane.b32.xlu0 %v341, 16
      %v488 = vpop.permute.xlu0 %487
      %489 = vrot.lane.b32.xlu0 %v353, 16
      %v490 = vpop.permute.xlu0 %489
      %491 = vrot.lane.b32.xlu0 %v365, 16
      %v492 = vpop.permute.xlu0 %491
      %493 = vrot.lane.b32.xlu0 %v377, 16
      %v494 = vpop.permute.xlu0 %493
      %495 = vrot.lane.b32.xlu0 %v389, 16
      %v496 = vpop.permute.xlu0 %495
      %497 = vrot.lane.b32.xlu0 %v482, 16
      %v498 = vpop.permute.xlu0 %497
      %v499 = vrot.slane %v451, 1
      %v500 = vrot.slane %v470, 1
      %v501 = vsel %vm406, %v499, %v500
      %502 = vrot.lane.b32.xlu0 %v412, 20
      %v503 = vpop.permute.xlu0 %502
      %504 = vrot.lane.b32.xlu0 %v415, 20
      %v505 = vpop.permute.xlu0 %504
      %506 = vrot.lane.b32.xlu0 %v418, 20
      %v507 = vpop.permute.xlu0 %506
      %508 = vrot.lane.b32.xlu0 %v421, 20
      %v509 = vpop.permute.xlu0 %508
      %510 = vrot.lane.b32.xlu0 %v424, 20
      %v511 = vpop.permute.xlu0 %510
      %512 = vrot.lane.b32.xlu0 %v427, 20
      %v513 = vpop.permute.xlu0 %512
      %514 = vrot.lane.b32.xlu0 %v430, 20
      %v515 = vpop.permute.xlu0 %514
      %516 = vrot.lane.b32.xlu0 %v501, 20
      %v517 = vpop.permute.xlu0 %516
      %v520 = vunpack.c.l.b16 %v226
      %v521 = vunpack.c.l.b16 %v227
      %v522 = vpack.c.b16 %v521, %v520
      %523 = vrot.lane.b32.xlu0 %v263, 24
      %v524 = vpop.permute.xlu0 %523
      %525 = vrot.lane.b32.xlu0 %v264, 24
      %v526 = vpop.permute.xlu0 %525
      %527 = vrot.lane.b32.xlu0 %v265, 24
      %v528 = vpop.permute.xlu0 %527
      %529 = vrot.lane.b32.xlu0 %v266, 24
      %v530 = vpop.permute.xlu0 %529
      %531 = vrot.lane.b32.xlu0 %v267, 24
      %v532 = vpop.permute.xlu0 %531
      %533 = vrot.lane.b32.xlu0 %v268, 24
      %v534 = vpop.permute.xlu0 %533
      %535 = vrot.lane.b32.xlu0 %v451, 24
      %v536 = vpop.permute.xlu0 %535
      %537 = vrot.lane.b32.xlu0 %v522, 24
      %v538 = vpop.permute.xlu0 %537
      %v540 = vunpack.c.l.b16 %v228
      %v541 = vpack.c.b16 %v540, %v540
      %v543 = vshrl.u32 %v522, 16
      %v545 = vshll.u32 %v522, 16
      %v547 = vrot.slane %v545, 1
      %v548 = vor.u32 %v543, %v547
      %v550 = vshll.u32 %v541, 16
      %v552 = vrot.slane %v550, 1
      %v553 = vsel %vm293, %v548, %v552
      %554 = vrot.lane.b32.xlu0 %v329, 28
      %v555 = vpop.permute.xlu0 %554
      %556 = vrot.lane.b32.xlu0 %v341, 28
      %v557 = vpop.permute.xlu0 %556
      %558 = vrot.lane.b32.xlu0 %v353, 28
      %v559 = vpop.permute.xlu0 %558
      %560 = vrot.lane.b32.xlu0 %v365, 28
      %v561 = vpop.permute.xlu0 %560
      %562 = vrot.lane.b32.xlu0 %v377, 28
      %v563 = vpop.permute.xlu0 %562
      %564 = vrot.lane.b32.xlu0 %v389, 28
      %v565 = vpop.permute.xlu0 %564
      %566 = vrot.lane.b32.xlu0 %v482, 28
      %v567 = vpop.permute.xlu0 %566
      %568 = vrot.lane.b32.xlu0 %v553, 28
      %v569 = vpop.permute.xlu0 %568
      %v570 = vrot.slane %v522, 1
      %v571 = vrot.slane %v541, 1
      %v572 = vsel %vm406, %v570, %v571
      %573 = vrot.lane.b32.xlu0 %v415, 32
      %v574 = vpop.permute.xlu0 %573
      %575 = vrot.lane.b32.xlu0 %v418, 32
      %v576 = vpop.permute.xlu0 %575
      %577 = vrot.lane.b32.xlu0 %v421, 32
      %v578 = vpop.permute.xlu0 %577
      %579 = vrot.lane.b32.xlu0 %v424, 32
      %v580 = vpop.permute.xlu0 %579
      %581 = vrot.lane.b32.xlu0 %v427, 32
      %v582 = vpop.permute.xlu0 %581
      %583 = vrot.lane.b32.xlu0 %v430, 32
      %v584 = vpop.permute.xlu0 %583
      %585 = vrot.lane.b32.xlu0 %v501, 32
      %v586 = vpop.permute.xlu0 %585
      %587 = vrot.lane.b32.xlu0 %v572, 32
      %v588 = vpop.permute.xlu0 %587
      %vm589 = vcmask 31744
      %v591 = vsel %vm589, %v261, %v391
      %v593 = vsel %vm589, %v262, %v393
      %v595 = vsel %vm589, %v263, %v395
      %v597 = vsel %vm589, %v264, %v397
      %v599 = vsel %vm589, %v265, %v399
      %v601 = vsel %vm589, %v266, %v401
      %v603 = vsel %vm589, %v267, %v403
      %v605 = vsel %vm589, %v268, %v405
      %vm606 = vcmask 64512
      %v608 = vsel %vm606, %v591, %v432
      %v610 = vsel %vm606, %v593, %v434
      %v612 = vsel %vm606, %v595, %v436
      %v614 = vsel %vm606, %v597, %v438
      %v616 = vsel %vm606, %v599, %v440
      %v618 = vsel %vm606, %v601, %v442
      %v620 = vsel %vm606, %v603, %v444
      %v622 = vsel %vm606, %v605, %v446
      %vm623 = vcmask 97280
      %v625 = vsel %vm623, %v608, %v453
      %v627 = vsel %vm623, %v610, %v455
      %v629 = vsel %vm623, %v612, %v457
      %v631 = vsel %vm623, %v614, %v459
      %v633 = vsel %vm623, %v616, %v461
      %v635 = vsel %vm623, %v618, %v463
      %v637 = vsel %vm623, %v620, %v465
      %v639 = vsel %vm623, %v622, %v467
      %vm640 = vcmask 130048
      %v642 = vsel %vm640, %v625, %v484
      %v644 = vsel %vm640, %v627, %v486
      %v646 = vsel %vm640, %v629, %v488
      %v648 = vsel %vm640, %v631, %v490
      %v650 = vsel %vm640, %v633, %v492
      %v652 = vsel %vm640, %v635, %v494
      %v654 = vsel %vm640, %v637, %v496
      %v656 = vsel %vm640, %v639, %v498
      %vm657 = vcmask 162816
      %v659 = vsel %vm657, %v642, %v503
      %v661 = vsel %vm657, %v644, %v505
      %v663 = vsel %vm657, %v646, %v507
      %v665 = vsel %vm657, %v648, %v509
      %v667 = vsel %vm657, %v650, %v511
      %v669 = vsel %vm657, %v652, %v513
      %v671 = vsel %vm657, %v654, %v515
      %v673 = vsel %vm657, %v656, %v517
      %vm674 = vcmask 195584
      %v676 = vsel %vm674, %v659, %v524
      %v678 = vsel %vm674, %v661, %v526
      %v680 = vsel %vm674, %v663, %v528
      %v682 = vsel %vm674, %v665, %v530
      %v684 = vsel %vm674, %v667, %v532
      %v686 = vsel %vm674, %v669, %v534
      %v688 = vsel %vm674, %v671, %v536
      %v690 = vsel %vm674, %v673, %v538
      %vm691 = vcmask 228352
      %v693 = vsel %vm691, %v676, %v555
      %v695 = vsel %vm691, %v678, %v557
      %v697 = vsel %vm691, %v680, %v559
      %v699 = vsel %vm691, %v682, %v561
      %v701 = vsel %vm691, %v684, %v563
      %v703 = vsel %vm691, %v686, %v565
      %v705 = vsel %vm691, %v688, %v567
      %v707 = vsel %vm691, %v690, %v569
      %vm708 = vcmask 261120
      %v710 = vsel %vm708, %v693, %v574
      %v712 = vsel %vm708, %v695, %v576
      %v714 = vsel %vm708, %v697, %v578
      %v716 = vsel %vm708, %v699, %v580
      %v718 = vsel %vm708, %v701, %v582
      %v720 = vsel %vm708, %v703, %v584
      %v722 = vsel %vm708, %v705, %v586
      %v724 = vsel %vm708, %v707, %v588
      %v725 = vld [vmem:[%s1] sm:$0xf]
      %v726 = vld [vmem:[%s1 + $0x4] sm:$0xf]
      %v727 = vld [vmem:[%s1 + $0x8] sm:$0xf]
      %v728 = vld [vmem:[%s1 + $0xc] sm:$0xf]
      %v729 = vld [vmem:[%s1 + $0x10] sm:$0x3]
      %v730 = vld [vmem:[%s2] sm:$0x1]
      %v732 = vlaneseq
      %v733 = vshrl.u32 %v732, 7
      %v734 = vsub.s32 0, %v733
      %v735 = vrot.slane %v730, %v734
      %v742 = vunpack.c.l.b16 %v725
      %v743 = vunpack.c.l.b16 %v726
      %v744 = vunpack.c.l.b16 %v727
      %v745 = vunpack.c.l.b16 %v728
      %v746 = vunpack.c.l.b16 %v729
      %v747 = vpack.c.b16 %v743, %v742
      %v748 = vpack.c.b16 %v745, %v744
      %v749 = vpack.c.b16 %v746, %v746
      %vm752 = vcmask 293888
      %v753 = vsel %vm752, %v710, 0
      %v755 = vsel %vm752, %v712, 0
      %v757 = vsel %vm752, %v714, 0
      %v759 = vsel %vm752, %v716, 0
      %v761 = vsel %vm752, %v718, 0
      %v763 = vsel %vm752, %v720, 0
      %v765 = vsel %vm752, %v722, 0
      %v767 = vsel %vm752, %v724, 0
      %vm769 = vcmask 1041408
      %v771 = vsel %vm769, %v749, 0
      %773 = vmatprep.subr.bf16.mxu0 0
      %774 = vmatpush1.bf16.msra.mxu0 0
      %775 = vmatprep.subr.bf16.mxu0 0
      %776 = vmatpush1.bf16.msra.mxu0 0
      %777 = vmatprep.subr.bf16.mxu0 0
      %778 = vmatpush1.bf16.msra.mxu0 0
      %779 = vmatprep.subr.bf16.mxu0 0
      %780 = vmatpush1.bf16.msra.mxu0 0
      %781 = vmatprep.subr.bf16.mxu0 0
      %782 = vmatpush1.bf16.msra.mxu0 0
      %783 = vmatprep.subr.bf16.mxu0 0
      %784 = vmatpush1.bf16.msra.mxu0 %v771
      %785 = vmatprep.subr.bf16.mxu0 0
      %786 = vmatpush1.bf16.msra.mxu0 %v748
      %787 = vmatprep.subr.bf16.mxu0 0
      %788 = vmatpush1.bf16.msra.mxu0 %v747
      %789 = vmatprep.subr.bf16.mxu0 0
      %790 = vmatpush2.bf16.msra.mxu0 0
      %791 = vmatprep.subr.bf16.mxu0 0
      %792 = vmatpush2.bf16.msra.mxu0 0
      %793 = vmatprep.subr.bf16.mxu0 0
      %794 = vmatpush2.bf16.msra.mxu0 0
      %795 = vmatprep.subr.bf16.mxu0 0
      %796 = vmatpush2.bf16.msra.mxu0 0
      %797 = vmatprep.subr.bf16.mxu0 0
      %798 = vmatpush2.bf16.msra.mxu0 0
      %799 = vmatprep.subr.bf16.mxu0 0
      %800 = vmatpush2.bf16.msra.mxu0 0
      %801 = vmatprep.subr.bf16.mxu0 0
      %802 = vmatpush2.bf16.msra.mxu0 0
      %803 = vmatprep.subr.bf16.mxu0 0
      %804 = vmatpush2.bf16.msra.mxu0 0
      %805 = vmatprep.mubr.bf16.mxu0 0
      %806 = vmatmul.mubr.bf16.gmra.mxu0 %v753
      %v807 = vpop.f32.mrf.mxu0
      %v808 = vadd.f32 %v735, %v807
      %v809 = vpop.f32.mrf.mxu0
      %v810 = vpop.f32.mrf.mxu0
      %v811 = vadd.f32 %v735, %v810
      %v812 = vpop.f32.mrf.mxu0
      %813 = vmatprep.mubr.bf16.mxu0 0
      %814 = vmatmul.mubr.bf16.gmra.mxu0 %v755
      %v815 = vpop.f32.mrf.mxu0
      %v816 = vadd.f32 %v735, %v815
      %v817 = vpop.f32.mrf.mxu0
      %v818 = vpop.f32.mrf.mxu0
      %v819 = vadd.f32 %v735, %v818
      %v820 = vpop.f32.mrf.mxu0
      %821 = vmatprep.mubr.bf16.mxu0 0
      %822 = vmatmul.mubr.bf16.gmra.mxu0 %v757
      %v823 = vpop.f32.mrf.mxu0
      %v824 = vadd.f32 %v735, %v823
      %v825 = vpop.f32.mrf.mxu0
      %v826 = vpop.f32.mrf.mxu0
      %v827 = vadd.f32 %v735, %v826
      %v828 = vpop.f32.mrf.mxu0
      %829 = vmatprep.mubr.bf16.mxu0 0
      %830 = vmatmul.mubr.bf16.gmra.mxu0 %v759
      %v831 = vpop.f32.mrf.mxu0
      %v832 = vadd.f32 %v735, %v831
      %v833 = vpop.f32.mrf.mxu0
      %v834 = vpop.f32.mrf.mxu0
      %v835 = vadd.f32 %v735, %v834
      %v836 = vpop.f32.mrf.mxu0
      %837 = vmatprep.mubr.bf16.mxu0 0
      %838 = vmatmul.mubr.bf16.gmra.mxu0 %v761
      %v839 = vpop.f32.mrf.mxu0
      %v840 = vadd.f32 %v735, %v839
      %v841 = vpop.f32.mrf.mxu0
      %v842 = vpop.f32.mrf.mxu0
      %v843 = vadd.f32 %v735, %v842
      %v844 = vpop.f32.mrf.mxu0
      %845 = vmatprep.mubr.bf16.mxu0 0
      %846 = vmatmul.mubr.bf16.gmra.mxu0 %v763
      %v847 = vpop.f32.mrf.mxu0
      %v848 = vadd.f32 %v735, %v847
      %v849 = vpop.f32.mrf.mxu0
      %v850 = vpop.f32.mrf.mxu0
      %v851 = vadd.f32 %v735, %v850
      %v852 = vpop.f32.mrf.mxu0
      %853 = vmatprep.mubr.bf16.mxu0 0
      %854 = vmatmul.mubr.bf16.gmra.mxu0 %v765
      %v855 = vpop.f32.mrf.mxu0
      %v856 = vadd.f32 %v735, %v855
      %v857 = vpop.f32.mrf.mxu0
      %v858 = vpop.f32.mrf.mxu0
      %v859 = vadd.f32 %v735, %v858
      %v860 = vpop.f32.mrf.mxu0
      %861 = vmatprep.mubr.bf16.mxu0 0
      %862 = vmatmul.mubr.bf16.gmra.mxu0 %v767
      %v863 = vpop.f32.mrf.mxu0
      %v864 = vadd.f32 %v735, %v863
      %v865 = vpop.f32.mrf.mxu0
      %v866 = vpop.f32.mrf.mxu0
      %v867 = vadd.f32 %v735, %v866
      %v868 = vpop.f32.mrf.mxu0
      %869 = vdwg.mxu0
      %v870 = vmax.f32 %v808, 0.0
      %v871 = vmax.f32 %v811, 0.0
      %v872 = vmax.f32 %v816, 0.0
      %v873 = vmax.f32 %v819, 0.0
      %v874 = vmax.f32 %v824, 0.0
      %v875 = vmax.f32 %v827, 0.0
      %v876 = vmax.f32 %v832, 0.0
      %v877 = vmax.f32 %v835, 0.0
      %v878 = vmax.f32 %v840, 0.0
      %v879 = vmax.f32 %v843, 0.0
      %v880 = vmax.f32 %v848, 0.0
      %v881 = vmax.f32 %v851, 0.0
      %v882 = vmax.f32 %v856, 0.0
      %v883 = vmax.f32 %v859, 0.0
      %v884 = vmax.f32 %v864, 0.0
      %v885 = vmax.f32 %v867, 0.0
      %v886 = vpack.c.bf16 %v871, %v870
      %v887 = vpack.c.bf16 %v873, %v872
      %v888 = vpack.c.bf16 %v875, %v874
      %v889 = vpack.c.bf16 %v877, %v876
      %v890 = vpack.c.bf16 %v879, %v878
      %v891 = vpack.c.bf16 %v881, %v880
      %v892 = vpack.c.bf16 %v883, %v882
      %v893 = vpack.c.bf16 %v885, %v884
      %v902 = vunpack.c.l.b16 %v886
      %v903 = vunpack.c.h.b16 %v886
      %v904 = vunpack.c.l.b16 %v887
      %v905 = vunpack.c.h.b16 %v887
      %v906 = vunpack.c.l.b16 %v888
      %v907 = vunpack.c.h.b16 %v888
      %v908 = vunpack.c.l.b16 %v889
      %v909 = vunpack.c.h.b16 %v889
      %v910 = vunpack.c.l.b16 %v890
      %v911 = vunpack.c.h.b16 %v890
      %v912 = vunpack.c.l.b16 %v891
      %v913 = vunpack.c.h.b16 %v891
      %v914 = vunpack.c.l.b16 %v892
      %v915 = vunpack.c.h.b16 %v892
      %v916 = vunpack.c.l.b16 %v893
      %v917 = vunpack.c.h.b16 %v893
      %v918 = vpack.c.b16 %v902, %v902
      %v919 = vpack.c.b16 %v903, %v903
      %v920 = vpack.c.b16 %v904, %v904
      %v921 = vpack.c.b16 %v905, %v905
      %v922 = vpack.c.b16 %v906, %v906
      %v923 = vpack.c.b16 %v907, %v907
      %v924 = vpack.c.b16 %v908, %v908
      %v925 = vpack.c.b16 %v909, %v909
      %v926 = vpack.c.b16 %v910, %v910
      %v927 = vpack.c.b16 %v911, %v911
      %v928 = vpack.c.b16 %v912, %v912
      %v929 = vpack.c.b16 %v913, %v913
      %v930 = vpack.c.b16 %v914, %v914
      %v931 = vpack.c.b16 %v915, %v915
      %v932 = vpack.c.b16 %v916, %v916
      %v933 = vpack.c.b16 %v917, %v917
      %950 = vst [vmem:[%s192] sm:$0xf] %v918
      %951 = vst [vmem:[%s192 + $0x4] sm:$0xf] %v919
      %952 = vst [vmem:[%s192 + $0x8] sm:$0xf] %v920
      %953 = vst [vmem:[%s192 + $0xc] sm:$0xf] %v921
      %954 = vst [vmem:[%s192 + $0x10] sm:$0xf] %v922
      %955 = vst [vmem:[%s192 + $0x14] sm:$0xf] %v923
      %956 = vst [vmem:[%s192 + $0x18] sm:$0xf] %v924
      %957 = vst [vmem:[%s192 + $0x1c] sm:$0xf] %v925
      %958 = vst [vmem:[%s192 + $0x20] sm:$0xf] %v926
      %959 = vst [vmem:[%s192 + $0x24] sm:$0xf] %v927
      %960 = vst [vmem:[%s192 + $0x28] sm:$0xf] %v928
      %961 = vst [vmem:[%s192 + $0x2c] sm:$0xf] %v929
      %962 = vst [vmem:[%s192 + $0x30] sm:$0xf] %v930
      %963 = vst [vmem:[%s192 + $0x34] sm:$0xf] %v931
      %964 = vst [vmem:[%s192 + $0x38] sm:$0xf] %v932
      %965 = vst [vmem:[%s192 + $0x3c] sm:$0xf] %v933
      %s966 = smul.u32 16, %s19
      %p967 = scmp.lt.s32.totalorder %s18, 1
      %s968 = scalar_select %p967, %s18, 1
      %p969 = scmp.lt.s32.totalorder %s966, 31
      %s970 = scalar_select %p969, %s966, 31
      %s971 = smul.addr %s968, 32
      %s972 = sadd.s32 %s970, %s971
      %s973 = smul.addr %s972, 4
      %s974 = scalar_lea.vmem %s3, %s973
      // Predicated region
      $region33: #{decoder_block.1} parent=31 // pred_check
        %p975 = pneg %p114
      $region34: #{decoder_block.1} parent=31 // pred_check_branch
        %977 = sbr.rel (%p975) target = $region36
      $region35: #{decoder_block.1} parent=31 // pred_region
        %s978 = smul.u32 16, %s19
      $region36: #{decoder_block.1} parent=31 // pred_fallthru
        _
    $region32: #{decoder_block.1} parent=5 // pred_fallthru
      _
    %p979 = scmp.le.s32.totalorder 2, %s9
    // Predicated region
    $region37: #{decoder_block.1} parent=5 // pred_check
      %p980 = pneg %p979
    $region38: #{decoder_block.1} parent=5 // pred_check_branch
      %982 = sbr.rel (%p980) target = $region40
    $region39: #{decoder_block.1} parent=5 // pred_region
      %s983 = ssub.s32 %s9, 2
      // Predicated region
      $region41: #{decoder_block.1} parent=39 // pred_check
        %p984 = pneg %p120
      $region42: #{decoder_block.1} parent=39 // pred_check_branch
        %986 = sbr.rel (%p984) target = $region44
      $region43: #{decoder_block.1} parent=39 // pred_region
        %s987 = smul.u32 16, %s21
        %p988 = scmp.lt.s32.totalorder %s20, 1
        %s989 = scalar_select %p988, %s20, 1
        %p990 = scmp.lt.s32.totalorder %s987, 31
        %s991 = scalar_select %p990, %s987, 31
        %s992 = smul.addr %s989, 32
        %s993 = sadd.s32 %s991, %s992
        %s994 = smul.addr %s993, 4
        %s995 = scalar_lea.vmem %s3, %s994
      $region44: #{decoder_block.1} parent=39 // pred_fallthru
        _
    $region40: #{decoder_block.1} parent=5 // pred_fallthru
      _
  $region6: #{decoder_block.1} parent=0 // loop_footer
    %s13 = sadd.s32 1, %s9
  $region7: #{decoder_block.1} parent=0 // loop_footer_branch
    %8 = sbr.rel target = $region3
  $region8: #{decoder_block.1} parent=0 // loop_exit
    _

</llo_original>
